<compile_context>
chip_gen: v7x
topology: tpu7x:2x2x1
jax: 0.10.0
libtpu: 0.0.40
codegen_flags: <defaults>
</compile_context>

<pallas_src>
import functools

import jax
import jax.numpy as jnp
from jax.experimental import pallas as pl
from jax.experimental.pallas import tpu as pltpu


def _round_up(x, m):
    return ((x + m - 1) // m) * m


def _cdiv(a, b):
    return (a + b - 1) // b


# ---------------------------------------------------------------------------
# Pass 1: global softmax denominator for the mixture weight.
#   total = sum over the whole (B, NI) logit grid of exp(w_k(sigmoid(w_m m + w_t tau)))
# Gridded over batch tiles; padded batch lanes are masked out.
# Layout: batch on the 128-lane axis (inp_t is (2, Bp)).
# ---------------------------------------------------------------------------
def weight_sum_kernel(inp_ref, wm_ref, bm_ref, wt_ref, bt_ref, wk_t_ref, bk_ref,
                      sum_ref, *, total_b, tile_b):
    i = pl.program_id(0)

    @pl.when(i == 0)
    def _():
        sum_ref[...] = jnp.zeros_like(sum_ref)

    m_row = inp_ref[0:1, :]                                        # (1, TB)
    tau_row = inp_ref[1:2, :]                                      # (1, TB)
    a = jax.nn.sigmoid(wm_ref[...] * m_row + bm_ref[...]
                       + wt_ref[...] * tau_row + bt_ref[...])      # (HW, TB)
    aa = jnp.dot(wk_t_ref[...], a,
                 preferred_element_type=jnp.float32) + bk_ref[...]  # (NI, TB)
    e = jnp.exp(aa)
    # Mask out padded batch lanes so they don't pollute the global sum.
    lane = jax.lax.broadcasted_iota(jnp.int32, e.shape, 1) + i * tile_b
    e = jnp.where(lane < total_b, e, 0.0)
    sum_ref[...] += jnp.sum(jnp.sum(e, axis=-1, keepdims=True),
                            axis=0, keepdims=True)                  # (1, 1)


# ---------------------------------------------------------------------------
# Pass 2: fused ensemble + mixture weighting, one batch tile per grid step.
# Per-model layers are pre-packed into block-diagonal (P, P) bf16 matrices
# (P = model_count * hidden = 96); activations are (P, TB) with batch on lanes.
# ---------------------------------------------------------------------------
def ensemble_kernel(total_ref, inp_ref,
                    wm_ref, bm_ref, wt_ref, bt_ref, wk_t_ref, bk_ref,
                    ws_ref, bs_ref, wa_ref, ba_ref,
                    wmh_ref, bmh_ref, wth_ref, bth_ref,
                    wnh_ref, bnh_ref, wnh2_ref, bnh2_ref,
                    wnh3_ref, bnh3_ref, exp_last_ref,
                    out_ref):
    m_row = inp_ref[0:1, :]                                        # (1, TB)
    tau_row = inp_ref[1:2, :]                                      # (1, TB)

    # Mixture weight for this tile; global denominator comes from pass 1.
    a = jax.nn.sigmoid(wm_ref[...] * m_row + bm_ref[...]
                       + wt_ref[...] * tau_row + bt_ref[...])      # (HW, TB)
    aa = jnp.dot(wk_t_ref[...], a,
                 preferred_element_type=jnp.float32) + bk_ref[...]  # (NI, TB)
    weight = jnp.exp(aa) * (1.0 / total_ref[...])                   # (NI, TB)

    # Fused first layers for all models: Linear(1, h0) is a broadcast mul-add.
    m_all = jnp.tanh(ws_ref[...] * m_row + bs_ref[...])             # (P, TB) f32
    tau_all = jax.nn.sigmoid(wa_ref[...] * tau_row + ba_ref[...])   # (P, TB) f32

    def layer(w_ref, b_ref, x):
        # bf16 MXU matmul (block-diagonal ensemble weight), f32 accumulate.
        y = jnp.dot(w_ref[...], x.astype(jnp.bfloat16),
                    preferred_element_type=jnp.float32)
        return jax.nn.relu(y + b_ref[...])

    m_all = layer(wmh_ref, bmh_ref, m_all)                           # (P, TB)
    tau_all = layer(wth_ref, bth_ref, tau_all)                       # (P, TB)
    tm = m_all * tau_all
    etm = layer(wnh_ref, bnh_ref, tm)
    etm = layer(wnh2_ref, bnh2_ref, etm)
    etm = layer(wnh3_ref, bnh3_ref, etm)                             # (P, TB)

    # sum_i (etm_i @ exp(last_i)) for all models as ONE (1,P)@(P,TB) MXU matmul
    # (exp(last) precomputed host-side, zero-padded so padding contributes 0).
    s_row = jnp.dot(exp_last_ref[...], etm.astype(jnp.bfloat16),
                    preferred_element_type=jnp.float32)              # (1, TB)

    # Mixture weight applied once (hoisted out of the ensemble).
    out_ref[...] = weight * s_row                                    # (NI, TB)


# ---------------------------------------------------------------------------
# Host-side parameter packing (done once, outside the kernels).
# ---------------------------------------------------------------------------
def pack_params(params, model_count, hidden_list, pad=None):
    (w_wm, b_wm, w_wt, b_wt, w_wk, b_wk,
     w_smile, b_smile, w_act, b_act,
     w_mh, b_mh, w_th, b_th,
     w_nh, b_nh, w_nh2, b_nh2, w_nh3, b_nh3, last) = [
         jnp.asarray(p, jnp.float32) for p in params]
    M = model_count
    h0, h1, h2, h3, h4 = hidden_list
    P = pad if pad is not None else _round_up(M * max(hidden_list), 8)
    assert M * max(hidden_list) <= P, "pack width too small for fused ensemble"

    def col(x):                           # (1, H) -> (H, 1)
        return x.reshape(-1, 1)

    def pack_col(x, h):                   # (M, h) -> (P, 1), zero-padded
        v = x.reshape(M * h)
        return jnp.pad(v, (0, P - M * h)).reshape(P, 1)

    def pack_blockdiag(w, h_in, h_out):   # (M, h_in, h_out) -> (P, P) bf16
        z = jnp.zeros((P, P), jnp.float32)
        for i in range(M):
            z = z.at[i * h_out:(i + 1) * h_out,
                     i * h_in:(i + 1) * h_in].set(w[i].T)
        return z.astype(jnp.bfloat16)

    # exp(last_idden3) precomputed, zero-padded, laid out as a (1, P) row so
    # the final contraction is a single MXU matmul.
    exp_last_row = jnp.pad(jnp.exp(last.reshape(M * h4)),
                           (0, P - M * h4)).reshape(1, P).astype(jnp.bfloat16)

    wk = (col(w_wm), col(b_wm), col(w_wt), col(b_wt), w_wk.T, col(b_wk))
    ens = (pack_col(w_smile, h0), pack_col(b_smile, h0),
           pack_col(w_act, h0), pack_col(b_act, h0),
           pack_blockdiag(w_mh, h0, h1), pack_col(b_mh, h1),
           pack_blockdiag(w_th, h0, h1), pack_col(b_th, h1),
           pack_blockdiag(w_nh, h1, h2), pack_col(b_nh, h2),
           pack_blockdiag(w_nh2, h2, h3), pack_col(b_nh2, h3),
           pack_blockdiag(w_nh3, h3, h4), pack_col(b_nh3, h4),
           exp_last_row)
    return wk, ens


# ---------------------------------------------------------------------------
# Wrapper
# ---------------------------------------------------------------------------
def multi_option_volatility(inp, packed, input_size, *, batch_tile=4096):
    wk_params, ens_params = packed
    B = inp.shape[0]
    NI = input_size

    # Batch tiling: lanes, multiple of 128.  Keep >= 2 grid steps when the
    # padded batch allows so dual-TensorCore chips (v7x) shard the "parallel"
    # axis across both cores.
    Bp128 = _round_up(B, 128)
    nt = _cdiv(Bp128, batch_tile)
    if Bp128 > 128:
        nt = max(nt, 2)
    TB = _round_up(_cdiv(Bp128, nt), 128)
    Bp = nt * TB

    # Single host-side pad, done where the (2, B) transpose is materialized.
    inp_t = jnp.pad(inp.reshape(B, 2).astype(jnp.float32).T,
                    ((0, 0), (0, Bp - B)))                           # (2, Bp)

    const_vmem = pl.BlockSpec(memory_space=pltpu.MemorySpace.VMEM)

    # Pass 1: global softmax denominator (couples all batch rows).
    total = pl.pallas_call(
        functools.partial(weight_sum_kernel, total_b=B, tile_b=TB),
        out_shape=jax.ShapeDtypeStruct((1, 1), jnp.float32),
        grid=(nt,),
        in_specs=[pl.BlockSpec((2, TB), lambda i: (0, i))]
        + [const_vmem] * len(wk_params),
        out_specs=pl.BlockSpec((1, 1), lambda i: (0, 0)),
        compiler_params=pltpu.CompilerParams(
            dimension_semantics=("arbitrary",)),
    )(inp_t, *wk_params)

    # Pass 2: fused ensemble + mixture weighting, batch-tiled, lane-dense.
    out_t = pl.pallas_call(
        ensemble_kernel,
        out_shape=jax.ShapeDtypeStruct((NI, Bp), jnp.float32),
        grid=(nt,),
        in_specs=([const_vmem, pl.BlockSpec((2, TB), lambda i: (0, i))]
                  + [const_vmem] * (len(wk_params) + len(ens_params))),
        out_specs=pl.BlockSpec((NI, TB), lambda i: (0, i)),
        compiler_params=pltpu.CompilerParams(
            dimension_semantics=("parallel",),
            vmem_limit_bytes=48 * 1024 * 1024),
    )(total, inp_t, *wk_params, *ens_params)

    out_t = out_t[:, :B]                                   # drop batch padding
    return out_t.T.reshape(B * NI, 1)                      # torch layout


# ---------------------------------------------------------------------------
# Parameter init (per-model layout matching the torch module) and a pure-JAX
# reference for correctness checking.
# ---------------------------------------------------------------------------
def init_params(key, model_count, hidden_list, input_size, hidden_weight_size):
    h0, h1, h2, h3, h4 = hidden_list
    M, HW, NI = model_count, hidden_weight_size, input_size
    keys = jax.random.split(key, 21)

    def rn(k, shape, scale=0.3):
        return (scale * jax.random.normal(k, shape)).astype(jnp.float32)

    return (
        rn(keys[0], (1, HW)), rn(keys[1], (1, HW)),        # w_m
        rn(keys[2], (1, HW)), rn(keys[3], (1, HW)),        # w_t
        rn(keys[4], (HW, NI)), rn(keys[5], (1, NI)),       # w_k
        rn(keys[6], (M, h0)), rn(keys[7], (M, h0)),        # fc_smile (per model)
        rn(keys[8], (M, h0)), rn(keys[9], (M, h0)),        # fc_act   (per model)
        rn(keys[10], (M, h0, h1)), rn(keys[11], (M, h1)),  # mh
        rn(keys[12], (M, h0, h1)), rn(keys[13], (M, h1)),  # th
        rn(keys[14], (M, h1, h2)), rn(keys[15], (M, h2)),  # new_hidden
        rn(keys[16], (M, h2, h3)), rn(keys[17], (M, h3)),  # new_hidden2
        rn(keys[18], (M, h3, h4)), rn(keys[19], (M, h4)),  # new_hidden3
        rn(keys[20], (M, h4)),                             # last_idden3 (flat)
    )


def reference(inp, params, model_count):
    (w_wm, b_wm, w_wt, b_wt, w_wk, b_wk,
     w_smile, b_smile, w_act, b_act,
     w_mh, b_mh, w_th, b_th,
     w_nh, b_nh, w_nh2, b_nh2, w_nh3, b_nh3, last) = params
    B = inp.shape[0]
    inp2 = inp.reshape(B, 2)
    m_in, tau_in = inp2[:, 0:1], inp2[:, 1:2]
    a = jax.nn.sigmoid(m_in * w_wm + b_wm + tau_in * w_wt + b_wt)
    aaa = jnp.exp(a @ w_wk + b_wk)
    weight = aaa / jnp.sum(aaa)
    acc = jnp.zeros_like(weight)
    for i in range(model_count):
        m = jnp.tanh(m_in * w_smile[i:i + 1] + b_smile[i:i + 1])
        tau = jax.nn.sigmoid(tau_in * w_act[i:i + 1] + b_act[i:i + 1])
        m = jax.nn.relu(m @ w_mh[i] + b_mh[i:i + 1])
        tau = jax.nn.relu(tau @ w_th[i] + b_th[i:i + 1])
        tm = m * tau
        etm = jax.nn.relu(tm @ w_nh[i] + b_nh[i:i + 1])
        etm = jax.nn.relu(etm @ w_nh2[i] + b_nh2[i:i + 1])
        etm = jax.nn.relu(etm @ w_nh3[i] + b_nh3[i:i + 1])
        s = jnp.sum(etm * jnp.exp(last[i:i + 1]), axis=-1, keepdims=True)
        acc = acc + s * weight
    return acc.reshape(-1, 1)


if __name__ == "__main__":
    B = 8
    input_size = 4
    model_count = 3
    single_model_hidden_size = [32, 32, 32, 32, 32]
    hidden_weight_size = 32

    key = jax.random.PRNGKey(0)
    k_inp, k_par = jax.random.split(key)
    inp = jax.random.normal(k_inp, (B, 1, 2), dtype=jnp.float32)   # (B, 1, [m, tau])
    params = init_params(k_par, model_count, single_model_hidden_size,
                         input_size, hidden_weight_size)
    packed = pack_params(params, model_count, single_model_hidden_size)

    out = multi_option_volatility(inp, packed, input_size)
    out = jax.block_until_ready(out)

    ref = reference(inp, params, model_count)
    assert out.shape == (B * input_size, 1), out.shape
    err = float(jnp.max(jnp.abs(out - ref)))
    scale = float(jnp.max(jnp.abs(ref))) + 1e-6
    # bf16 MXU matmuls vs. f32 reference -> allow ~2% relative error.
    assert err <= 2e-2 * scale + 1e-4, (err, scale)
    print("KERNEL_OK")
</pallas_src>

<mosaic_0001>
module attributes {stable_mosaic.version = 11 : i64} {
  func.func @weight_sum_kernel(%arg0: i32, %arg1: memref<2x128xf32, #tpu.memory_space<vmem>>, %arg2: memref<32x1xf32, #tpu.memory_space<vmem>>, %arg3: memref<32x1xf32, #tpu.memory_space<vmem>>, %arg4: memref<32x1xf32, #tpu.memory_space<vmem>>, %arg5: memref<32x1xf32, #tpu.memory_space<vmem>>, %arg6: memref<4x32xf32, #tpu.memory_space<vmem>>, %arg7: memref<4x1xf32, #tpu.memory_space<vmem>>, %arg8: memref<1x1xf32, #tpu.memory_space<vmem>>) attributes {dimension_semantics = [#tpu.dimension_semantics<arbitrary>], iteration_bounds = array<i64: 1>, scalar_prefetch = 0 : i64, scratch_operands = 0 : i64, tpu.core_type = #tpu.core_type<tc>, window_params = [{transform_indices = @transform_0, window_bounds = array<i64: 2, 128>}, {pipeline_mode = #tpu.pipeline_mode<synchronous>, transform_indices = @transform_1, window_bounds = array<i64: 32, 1>}, {pipeline_mode = #tpu.pipeline_mode<synchronous>, transform_indices = @transform_2, window_bounds = array<i64: 32, 1>}, {pipeline_mode = #tpu.pipeline_mode<synchronous>, transform_indices = @transform_3, window_bounds = array<i64: 32, 1>}, {pipeline_mode = #tpu.pipeline_mode<synchronous>, transform_indices = @transform_4, window_bounds = array<i64: 32, 1>}, {pipeline_mode = #tpu.pipeline_mode<synchronous>, transform_indices = @transform_5, window_bounds = array<i64: 4, 32>}, {pipeline_mode = #tpu.pipeline_mode<synchronous>, transform_indices = @transform_6, window_bounds = array<i64: 4, 1>}, {pipeline_mode = #tpu.pipeline_mode<synchronous>, transform_indices = @transform_7, window_bounds = array<i64: 1, 1>}]} {
    %c0_i32 = arith.constant 0 : i32
    %0 = arith.cmpi eq, %arg0, %c0_i32 : i32
    %1 = arith.extui %0 : i1 to i32
    %c0_i32_0 = arith.constant 0 : i32
    %2 = arith.cmpi ne, %1, %c0_i32_0 : i32
    scf.if %2 {
      %cst_23 = arith.constant 0.000000e+00 : f32
      %46 = vector.broadcast %cst_23 : f32 to vector<1x1xf32>
      %c0_24 = arith.constant 0 : index
      %c0_25 = arith.constant 0 : index
      %47 = vector.load %arg8[%c0_24, %c0_25] : memref<1x1xf32, #tpu.memory_space<vmem>>, vector<1x1xf32>
      tpu.vector_store %arg8[%c0_24, %c0_25], %46 {strides = array<i32>} : memref<1x1xf32, #tpu.memory_space<vmem>>, vector<1x1xf32>,
    } else {
    }
    %c0 = arith.constant 0 : index
    %c0_1 = arith.constant 0 : index
    %3 = vector.load %arg1[%c0, %c0_1] : memref<2x128xf32, #tpu.memory_space<vmem>>, vector<1x128xf32>
    %c1 = arith.constant 1 : index
    %c0_2 = arith.constant 0 : index
    %4 = vector.load %arg1[%c1, %c0_2] : memref<2x128xf32, #tpu.memory_space<vmem>>, vector<1x128xf32>
    %c0_3 = arith.constant 0 : index
    %c0_4 = arith.constant 0 : index
    %5 = vector.load %arg2[%c0_3, %c0_4] : memref<32x1xf32, #tpu.memory_space<vmem>>, vector<32x1xf32>
    %6 = vector.broadcast %5 : vector<32x1xf32> to vector<32x128xf32>
    %7 = vector.broadcast %3 : vector<1x128xf32> to vector<32x128xf32>
    %8 = arith.mulf %6, %7 : vector<32x128xf32>
    %c0_5 = arith.constant 0 : index
    %c0_6 = arith.constant 0 : index
    %9 = vector.load %arg3[%c0_5, %c0_6] : memref<32x1xf32, #tpu.memory_space<vmem>>, vector<32x1xf32>
    %10 = vector.broadcast %9 : vector<32x1xf32> to vector<32x128xf32>
    %11 = arith.addf %8, %10 : vector<32x128xf32>
    %c0_7 = arith.constant 0 : index
    %c0_8 = arith.constant 0 : index
    %12 = vector.load %arg4[%c0_7, %c0_8] : memref<32x1xf32, #tpu.memory_space<vmem>>, vector<32x1xf32>
    %13 = vector.broadcast %12 : vector<32x1xf32> to vector<32x128xf32>
    %14 = vector.broadcast %4 : vector<1x128xf32> to vector<32x128xf32>
    %15 = arith.mulf %13, %14 : vector<32x128xf32>
    %16 = arith.addf %11, %15 : vector<32x128xf32>
    %c0_9 = arith.constant 0 : index
    %c0_10 = arith.constant 0 : index
    %17 = vector.load %arg5[%c0_9, %c0_10] : memref<32x1xf32, #tpu.memory_space<vmem>>, vector<32x1xf32>
    %18 = vector.broadcast %17 : vector<32x1xf32> to vector<32x128xf32>
    %19 = arith.addf %16, %18 : vector<32x128xf32>
    %20 = arith.negf %19 : vector<32x128xf32>
    %21 = math.exp %20 : vector<32x128xf32>
    %cst = arith.constant 1.000000e+00 : f32
    %22 = vector.broadcast %cst : f32 to vector<32x128xf32>
    %23 = arith.addf %22, %21 : vector<32x128xf32>
    %24 = arith.divf %22, %23 : vector<32x128xf32>
    %c0_11 = arith.constant 0 : index
    %c0_12 = arith.constant 0 : index
    %25 = vector.load %arg6[%c0_11, %c0_12] : memref<4x32xf32, #tpu.memory_space<vmem>>, vector<4x32xf32>
    %cst_13 = arith.constant dense<0.000000e+00> : vector<4x128xf32>
    %26 = tpu.matmul %25, %24, %cst_13 {dimension_numbers = #tpu.dot_dimension_numbers<[1], [0], [0], [1], [0, 0, 1, 1], [], []>} : vector<4x32xf32>, vector<32x128xf32>, vector<4x128xf32> -> vector<4x128xf32>
    %c0_14 = arith.constant 0 : index
    %c0_15 = arith.constant 0 : index
    %27 = vector.load %arg7[%c0_14, %c0_15] : memref<4x1xf32, #tpu.memory_space<vmem>>, vector<4x1xf32>
    %28 = vector.broadcast %27 : vector<4x1xf32> to vector<4x128xf32>
    %29 = arith.addf %26, %28 : vector<4x128xf32>
    %30 = math.exp %29 : vector<4x128xf32>
    %31 = tpu.iota {dimensions = array<i32: 1>} : vector<4x128xi32>
    %c128_i32 = arith.constant 128 : i32
    %32 = arith.muli %arg0, %c128_i32 : i32
    %33 = vector.broadcast %32 : i32 to vector<4x128xi32>
    %34 = arith.addi %31, %33 : vector<4x128xi32>
    %c8_i32 = arith.constant 8 : i32
    %35 = vector.broadcast %c8_i32 : i32 to vector<4x128xi32>
    %36 = arith.cmpi slt, %34, %35 : vector<4x128xi32>
    %cst_16 = arith.constant 0.000000e+00 : f32
    %37 = vector.broadcast %cst_16 : f32 to vector<4x128xf32>
    %38 = arith.select %36, %30, %37 : vector<4x128xi1>, vector<4x128xf32>
    %c0_17 = arith.constant 0 : index
    %c0_18 = arith.constant 0 : index
    %39 = vector.load %arg8[%c0_17, %c0_18] : memref<1x1xf32, #tpu.memory_space<vmem>>, vector<1x1xf32>
    %cst_19 = arith.constant dense<0.000000e+00> : vector<4xf32>
    %40 = vector.multi_reduction <add>, %38, %cst_19 [1] : vector<4x128xf32> to vector<4xf32>
    %41 = vector.shape_cast %40 : vector<4xf32> to vector<4x1xf32>
    %cst_20 = arith.constant dense<0.000000e+00> : vector<1xf32>
    %42 = vector.multi_reduction <add>, %41, %cst_20 [0] : vector<4x1xf32> to vector<1xf32>
    %43 = vector.shape_cast %42 : vector<1xf32> to vector<1x1xf32>
    %44 = arith.addf %39, %43 : vector<1x1xf32>
    %c0_21 = arith.constant 0 : index
    %c0_22 = arith.constant 0 : index
    %45 = vector.load %arg8[%c0_21, %c0_22] : memref<1x1xf32, #tpu.memory_space<vmem>>, vector<1x1xf32>
    tpu.vector_store %arg8[%c0_21, %c0_22], %44 {strides = array<i32>} : memref<1x1xf32, #tpu.memory_space<vmem>>, vector<1x1xf32>,
    return
  }
  func.func @transform_0(%arg0: i32) -> (i32, i32) {
    %c0_i32 = arith.constant 0 : i32
    %c0_i32_0 = arith.constant 0 : i32
    return %c0_i32, %arg0 : i32, i32
  }
  func.func @transform_1(%arg0: i32) -> (i32, i32) {
    %c0_i32 = arith.constant 0 : i32
    %c0_i32_0 = arith.constant 0 : i32
    %c0_i32_1 = arith.constant 0 : i32
    return %c0_i32, %c0_i32_0 : i32, i32
  }
  func.func @transform_2(%arg0: i32) -> (i32, i32) {
    %c0_i32 = arith.constant 0 : i32
    %c0_i32_0 = arith.constant 0 : i32
    %c0_i32_1 = arith.constant 0 : i32
    return %c0_i32, %c0_i32_0 : i32, i32
  }
  func.func @transform_3(%arg0: i32) -> (i32, i32) {
    %c0_i32 = arith.constant 0 : i32
    %c0_i32_0 = arith.constant 0 : i32
    %c0_i32_1 = arith.constant 0 : i32
    return %c0_i32, %c0_i32_0 : i32, i32
  }
  func.func @transform_4(%arg0: i32) -> (i32, i32) {
    %c0_i32 = arith.constant 0 : i32
    %c0_i32_0 = arith.constant 0 : i32
    %c0_i32_1 = arith.constant 0 : i32
    return %c0_i32, %c0_i32_0 : i32, i32
  }
  func.func @transform_5(%arg0: i32) -> (i32, i32) {
    %c0_i32 = arith.constant 0 : i32
    %c0_i32_0 = arith.constant 0 : i32
    %c0_i32_1 = arith.constant 0 : i32
    return %c0_i32, %c0_i32_0 : i32, i32
  }
  func.func @transform_6(%arg0: i32) -> (i32, i32) {
    %c0_i32 = arith.constant 0 : i32
    %c0_i32_0 = arith.constant 0 : i32
    %c0_i32_1 = arith.constant 0 : i32
    return %c0_i32, %c0_i32_0 : i32, i32
  }
  func.func @transform_7(%arg0: i32) -> (i32, i32) {
    %c0_i32 = arith.constant 0 : i32
    %c0_i32_0 = arith.constant 0 : i32
    %c0_i32_1 = arith.constant 0 : i32
    return %c0_i32, %c0_i32_0 : i32, i32
  }
}

</mosaic_0001>

<llo_original>
// kernel: tpu_custom_call.1
$region0: #{tpu_custom_call.1}
  #allocation0 [shape = 'u32[]', space=smem, size = 0x4, offset = 0x4, fixed_abs, tag = 'smem constant byte address 0x4 - core index']
  #allocation1 [shape = 'u32[144,128]{1,0:T(1,128)}', space=vmem, size = 0x12000, scoped, tag = 'internal scratch']
  %s0 = inlined_call_operand.vmem [shape: f32[2,128], index: 0, kind: input, shape index: {}]
  %s1 = inlined_call_operand.vmem [shape: f32[32,1], index: 1, kind: input, shape index: {}]
  %s2 = inlined_call_operand.vmem [shape: f32[32,1], index: 2, kind: input, shape index: {}]
  %s3 = inlined_call_operand.vmem [shape: f32[32,1], index: 3, kind: input, shape index: {}]
  %s4 = inlined_call_operand.vmem [shape: f32[32,1], index: 4, kind: input, shape index: {}]
  %s5 = inlined_call_operand.vmem [shape: f32[4,32], index: 5, kind: input, shape index: {}]
  %s6 = inlined_call_operand.vmem [shape: f32[4,1], index: 6, kind: input, shape index: {}]
  %s7 = inlined_call_operand.hbm [shape: f32[1,1], index: 7, kind: output, shape index: {}]
  %s8 = sld [smem:[#allocation0]]
  $region42: #{tpu_custom_call.1} parent=0
    _
  %s10 = ssub.s32 1, %s8
  %s11 = scalar_select 0, %s10, %s8
  $region1: #{tpu_custom_call.1} parent=0
    #allocation2 [shape = 'u8[512]{0}', space=vmem, size = 0x400, scoped, tag = 'output window, operand 0, single buffered']
    #allocation3 [shape = 's32[1]{0}', space=sflag, size = 0x4, scoped, tag = 'scoped memory for tpu_custom_call.1']
    %12 = vsyncpa [#allocation3], 0
    // Predicated region
    $region2: #{tpu_custom_call.1} parent=1 // pred_check
      _
    $region3: #{tpu_custom_call.1} parent=1 // pred_check_branch
      %14 = sbr.rel (0) target = $region5
    $region4: #{tpu_custom_call.1} parent=1 // pred_region
      _
    $region5: #{tpu_custom_call.1} parent=1 // pred_fallthru
      _
    // Predicated region
    $region6: #{tpu_custom_call.1} parent=1 // pred_check
      _
    $region7: #{tpu_custom_call.1} parent=1 // pred_check_branch
      %16 = sbr.rel (0) target = $region9
    $region8: #{tpu_custom_call.1} parent=1 // pred_region
      _
    $region9: #{tpu_custom_call.1} parent=1 // pred_fallthru
      _
    // Predicated region
    $region10: #{tpu_custom_call.1} parent=1 // pred_check
      _
    $region11: #{tpu_custom_call.1} parent=1 // pred_check_branch
      %18 = sbr.rel (0) target = $region13
    $region12: #{tpu_custom_call.1} parent=1 // pred_region
      _
    $region13: #{tpu_custom_call.1} parent=1 // pred_fallthru
      _
    // Predicated region
    $region14: #{tpu_custom_call.1} parent=1 // pred_check
      _
    $region15: #{tpu_custom_call.1} parent=1 // pred_check_branch
      %20 = sbr.rel (0) target = $region17
    $region16: #{tpu_custom_call.1} parent=1 // pred_region
      _
    $region17: #{tpu_custom_call.1} parent=1 // pred_fallthru
      _
    // Predicated region
    $region18: #{tpu_custom_call.1} parent=1 // pred_check
      _
    $region19: #{tpu_custom_call.1} parent=1 // pred_check_branch
      %22 = sbr.rel (0) target = $region21
    $region20: #{tpu_custom_call.1} parent=1 // pred_region
      _
    $region21: #{tpu_custom_call.1} parent=1 // pred_fallthru
      _
    // Predicated region
    $region22: #{tpu_custom_call.1} parent=1 // pred_check
      _
    $region23: #{tpu_custom_call.1} parent=1 // pred_check_branch
      %24 = sbr.rel (0) target = $region25
    $region24: #{tpu_custom_call.1} parent=1 // pred_region
      _
    $region25: #{tpu_custom_call.1} parent=1 // pred_fallthru
      _
    // Predicated region
    $region26: #{tpu_custom_call.1} parent=1 // pred_check
      _
    $region27: #{tpu_custom_call.1} parent=1 // pred_check_branch
      %26 = sbr.rel (0) target = $region29
    $region28: #{tpu_custom_call.1} parent=1 // pred_region
      _
    $region29: #{tpu_custom_call.1} parent=1 // pred_fallthru
      _
    %p27 = scmp.eq.s32.totalorder 0, 0
    // Predicated region
    $region30: #{tpu_custom_call.1} parent=1 // pred_check
      %p28 = pneg %p27
    $region31: #{tpu_custom_call.1} parent=1 // pred_check_branch
      %30 = sbr.rel (%p28) target = $region33
    $region32: #{tpu_custom_call.1} parent=1 // pred_region
      %vm31 = vcmask 0
      %32 = vst.msk [vmem:[#allocation2] sm:$0x1] %vm31, 0.0
    $region33: #{tpu_custom_call.1} parent=1 // pred_fallthru
      _
    %v33 = vld [vmem:[%s0] sm:$0x1]
    %v34 = vld [vmem:[%s0 + $0x1] sm:$0x1]
    %v35 = vld [vmem:[%s1] sm:$0xff]
    %v36 = vld [vmem:[%s1 + $0x8] sm:$0xff]
    %v37 = vld [vmem:[%s1 + $0x10] sm:$0xff]
    %v38 = vld [vmem:[%s1 + $0x18] sm:$0xff]
    %40 = vset.pattern.permute.xlu0 0
    %41 = vperm.xlu0 %40, %v35
    %v42 = vpop.permute.xlu0 %41
    %45 = vset.pattern.permute.xlu0 0
    %46 = vperm.xlu0 %45, %v36
    %v47 = vpop.permute.xlu0 %46
    %50 = vset.pattern.permute.xlu0 0
    %51 = vperm.xlu0 %50, %v37
    %v52 = vpop.permute.xlu0 %51
    %55 = vset.pattern.permute.xlu0 0
    %56 = vperm.xlu0 %55, %v38
    %v57 = vpop.permute.xlu0 %56
    %v59 = vlaneseq
    %v60 = vshrl.u32 %v59, 7
    %v61 = vsub.s32 0, %v60
    %v62 = vrot.slane %v33, %v61
    %v63 = vmul.f32 %v42, %v62
    %v64 = vmul.f32 %v47, %v62
    %v65 = vmul.f32 %v52, %v62
    %v66 = vmul.f32 %v57, %v62
    %v67 = vld [vmem:[%s2] sm:$0xff]
    %v68 = vld [vmem:[%s2 + $0x8] sm:$0xff]
    %v69 = vld [vmem:[%s2 + $0x10] sm:$0xff]
    %v70 = vld [vmem:[%s2 + $0x18] sm:$0xff]
    %72 = vset.pattern.permute.xlu0 0
    %73 = vperm.xlu0 %72, %v67
    %v74 = vpop.permute.xlu0 %73
    %77 = vset.pattern.permute.xlu0 0
    %78 = vperm.xlu0 %77, %v68
    %v79 = vpop.permute.xlu0 %78
    %82 = vset.pattern.permute.xlu0 0
    %83 = vperm.xlu0 %82, %v69
    %v84 = vpop.permute.xlu0 %83
    %87 = vset.pattern.permute.xlu0 0
    %88 = vperm.xlu0 %87, %v70
    %v89 = vpop.permute.xlu0 %88
    %v91 = vadd.f32 %v63, %v74
    %v92 = vadd.f32 %v64, %v79
    %v93 = vadd.f32 %v65, %v84
    %v94 = vadd.f32 %v66, %v89
    %v95 = vld [vmem:[%s3] sm:$0xff]
    %v96 = vld [vmem:[%s3 + $0x8] sm:$0xff]
    %v97 = vld [vmem:[%s3 + $0x10] sm:$0xff]
    %v98 = vld [vmem:[%s3 + $0x18] sm:$0xff]
    %100 = vset.pattern.permute.xlu0 0
    %101 = vperm.xlu0 %100, %v95
    %v102 = vpop.permute.xlu0 %101
    %105 = vset.pattern.permute.xlu0 0
    %106 = vperm.xlu0 %105, %v96
    %v107 = vpop.permute.xlu0 %106
    %110 = vset.pattern.permute.xlu0 0
    %111 = vperm.xlu0 %110, %v97
    %v112 = vpop.permute.xlu0 %111
    %115 = vset.pattern.permute.xlu0 0
    %116 = vperm.xlu0 %115, %v98
    %v117 = vpop.permute.xlu0 %116
    %v119 = vlaneseq
    %v120 = vshrl.u32 %v119, 7
    %v121 = vsub.s32 0, %v120
    %v122 = vrot.slane %v34, %v121
    %v123 = vmul.f32 %v102, %v122
    %v124 = vmul.f32 %v107, %v122
    %v125 = vmul.f32 %v112, %v122
    %v126 = vmul.f32 %v117, %v122
    %v127 = vadd.f32 %v91, %v123
    %v128 = vadd.f32 %v92, %v124
    %v129 = vadd.f32 %v93, %v125
    %v130 = vadd.f32 %v94, %v126
    %v131 = vld [vmem:[%s4] sm:$0xff]
    %v132 = vld [vmem:[%s4 + $0x8] sm:$0xff]
    %v133 = vld [vmem:[%s4 + $0x10] sm:$0xff]
    %v134 = vld [vmem:[%s4 + $0x18] sm:$0xff]
    %136 = vset.pattern.permute.xlu0 0
    %137 = vperm.xlu0 %136, %v131
    %v138 = vpop.permute.xlu0 %137
    %141 = vset.pattern.permute.xlu0 0
    %142 = vperm.xlu0 %141, %v132
    %v143 = vpop.permute.xlu0 %142
    %146 = vset.pattern.permute.xlu0 0
    %147 = vperm.xlu0 %146, %v133
    %v148 = vpop.permute.xlu0 %147
    %151 = vset.pattern.permute.xlu0 0
    %152 = vperm.xlu0 %151, %v134
    %v153 = vpop.permute.xlu0 %152
    %v155 = vadd.f32 %v127, %v138
    %v156 = vadd.f32 %v128, %v143
    %v157 = vadd.f32 %v129, %v148
    %v158 = vadd.f32 %v130, %v153
    %v159 = vxor.u32 %v155, 2147483648
    %v160 = vxor.u32 %v156, 2147483648
    %v161 = vxor.u32 %v157, 2147483648
    %v162 = vxor.u32 %v158, 2147483648
    %v163 = vmul.f32 %v159, 1.442695
    %v164 = vpow.pop %v163
    %v165 = vmul.f32 %v160, 1.442695
    %v166 = vpow.pop %v165
    %v167 = vmul.f32 %v161, 1.442695
    %v168 = vpow.pop %v167
    %v169 = vmul.f32 %v162, 1.442695
    %v170 = vpow.pop %v169
    %v171 = vadd.f32 %v164, 1.0
    %v172 = vadd.f32 %v166, 1.0
    %v173 = vadd.f32 %v168, 1.0
    %v174 = vadd.f32 %v170, 1.0
    %v175 = vrcp.pop %v171
    %v176 = vmul.f32 1.0, %v175
    %v177 = vrcp.pop %v172
    %v178 = vmul.f32 1.0, %v177
    %v179 = vrcp.pop %v173
    %v180 = vmul.f32 1.0, %v179
    %v181 = vrcp.pop %v174
    %v182 = vmul.f32 1.0, %v181
    %v183 = vld [vmem:[%s5] sm:$0xf]
    %v184 = vld [vmem:[%s6] sm:$0xf]
    %186 = vset.pattern.permute.xlu0 0
    %187 = vperm.xlu0 %186, %v184
    %v188 = vpop.permute.xlu0 %187
    %vm190 = vcmask 261120
    %v192 = vsel %vm190, %v183, 0
    %194 = vmatprep.subr.mxu0 0.0
    %195 = vmatpush1.msra.mxu0 %v176
    %196 = vmatprep.subr.mxu0 0.0
    %197 = vmatpush1.msra.mxu0 %v178
    %198 = vmatprep.subr.mxu0 0.0
    %199 = vmatpush1.msra.mxu0 %v180
    %200 = vmatprep.subr.mxu0 0.0
    %201 = vmatpush1.msra.mxu0 %v182
    %202 = vmatprep.subr.mxu0 0.0
    %203 = vmatpush1.msra.mxu0 0.0
    %204 = vmatprep.subr.mxu0 0.0
    %205 = vmatpush1.msra.mxu0 0.0
    %206 = vmatprep.subr.mxu0 0.0
    %207 = vmatpush1.msra.mxu0 0.0
    %208 = vmatprep.subr.mxu0 0.0
    %209 = vmatpush1.msra.mxu0 0.0
    %210 = vmatprep.subr.mxu0 0.0
    %211 = vmatpush1.msra.mxu0 0.0
    %212 = vmatprep.subr.mxu0 0.0
    %213 = vmatpush1.msra.mxu0 0.0
    %214 = vmatprep.subr.mxu0 0.0
    %215 = vmatpush1.msra.mxu0 0.0
    %216 = vmatprep.subr.mxu0 0.0
    %217 = vmatpush1.msra.mxu0 0.0
    %218 = vmatprep.subr.mxu0 0.0
    %219 = vmatpush1.msra.mxu0 0.0
    %220 = vmatprep.subr.mxu0 0.0
    %221 = vmatpush1.msra.mxu0 0.0
    %222 = vmatprep.subr.mxu0 0.0
    %223 = vmatpush1.msra.mxu0 0.0
    %224 = vmatprep.subr.mxu0 0.0
    %225 = vmatpush1.msra.mxu0 0.0
    %226 = vmatprep.subr.mxu0 0.0
    %227 = vmatpush1.msra.mxu0 0.0
    %228 = vmatprep.subr.mxu0 0.0
    %229 = vmatpush1.msra.mxu0 0.0
    %230 = vmatprep.subr.mxu0 0.0
    %231 = vmatpush1.msra.mxu0 0.0
    %232 = vmatprep.subr.mxu0 0.0
    %233 = vmatpush1.msra.mxu0 0.0
    %234 = vmatprep.subr.mxu0 0.0
    %235 = vmatpush1.msra.mxu0 0.0
    %236 = vmatprep.subr.mxu0 0.0
    %237 = vmatpush1.msra.mxu0 0.0
    %238 = vmatprep.subr.mxu0 0.0
    %239 = vmatpush1.msra.mxu0 0.0
    %240 = vmatprep.subr.mxu0 0.0
    %241 = vmatpush1.msra.mxu0 0.0
    %242 = vmatprep.subr.mxu0 0.0
    %243 = vmatpush1.msra.mxu0 0.0
    %244 = vmatprep.subr.mxu0 0.0
    %245 = vmatpush1.msra.mxu0 0.0
    %246 = vmatprep.subr.mxu0 0.0
    %247 = vmatpush1.msra.mxu0 0.0
    %248 = vmatprep.subr.mxu0 0.0
    %249 = vmatpush1.msra.mxu0 0.0
    %250 = vmatprep.subr.mxu0 0.0
    %251 = vmatpush1.msra.mxu0 0.0
    %252 = vmatprep.subr.mxu0 0.0
    %253 = vmatpush1.msra.mxu0 0.0
    %254 = vmatprep.subr.mxu0 0.0
    %255 = vmatpush1.msra.mxu0 0.0
    %256 = vmatprep.subr.mxu0 0.0
    %257 = vmatpush1.msra.mxu0 0.0
    %258 = vmatprep.mubr.f32.mxu0 0.0
    %259 = vmatmul.mubr.f32.gmra.mrb[0].mxu0 %v192
    %v260 = vpop.f32.mrb[0].mxu0
    %v261 = vadd.f32 %v188, %v260
    %v262 = vpop.f32.mrb[0].mxu0
    %263 = vdwg.mxu0
    %v264 = vmul.f32 %v261, 1.442695
    %v265 = vpow.pop %v264
    %v266 = vlaneseq
    %v267 = vand.u32 %v266, 127
    %s268 = smul.u32 0, 128
    %v269 = vstv %s268
    %v270 = vadd.s32 %v267, %v269
    %vm271 = vcmp.lt.s32.totalorder %v270, 8
    %v272 = vsel %vm271, %v265, 0.0
    %v273 = vld [vmem:[#allocation2] sm:$0x1]
    %vm274 = vcmask 1043456
    %v275 = vsel %vm274, %v272, 0.0
    %276 = vadd.xlane.f32.xlu0 %v275
    %v277 = vpop.xlane.xlu0 %276
    %v278 = vsel %vm274, %v277, 0.0
    %v279 = vrot.slane %v278, 4
    %v280 = vadd.f32 %v278, %v279
    %v281 = vrot.slane %v280, 2
    %v282 = vadd.f32 %v280, %v281
    %v283 = vrot.slane %v282, 1
    %v284 = vadd.f32 %v282, %v283
    %v285 = vadd.f32 %v273, %v284
    %vm286 = vcmask 0
    %287 = vst.msk [vmem:[#allocation2] sm:$0x1] %vm286, %v285
    // Predicated region
    $region34: #{tpu_custom_call.1} parent=1 // pred_check
      _
    $region35: #{tpu_custom_call.1} parent=1 // pred_check_branch
      %289 = sbr.rel (0) target = $region37
    $region36: #{tpu_custom_call.1} parent=1 // pred_region
      %s291 = ssub.s32 16, 16
      %292 = vsyncadd [#allocation3], %s291
      %s294 = sshll.u32 [#allocation2], 4
      %s295 = int_to_ptr.vmem [resolvable:$true] %s294
      %297 = dma.vmem_to_hbm [thread:$0]  %s295, 16, %s7, [#allocation3]
    $region37: #{tpu_custom_call.1} parent=1 // pred_fallthru
      _
    // Predicated region
    $region38: #{tpu_custom_call.1} parent=1 // pred_check
      _
    $region39: #{tpu_custom_call.1} parent=1 // pred_check_branch
      %299 = sbr.rel (0) target = $region41
    $region40: #{tpu_custom_call.1} parent=1 // pred_region
      %300 = dma.done [#allocation3], 16
    $region41: #{tpu_custom_call.1} parent=1 // pred_fallthru
      _
    %301 = vsyncpa [#allocation3], 1

</llo_original>
